<compile_context>
chip_gen: v7x
topology: tpu7x:2x2x1
jax: 0.10.0
libtpu: 0.0.40
codegen_flags: <defaults>
</compile_context>

<pallas_src>
import jax
import jax.numpy as jnp
from jax.experimental import pallas as pl
from jax.experimental.pallas import tpu as pltpu


def _round_up(x, m):
    return ((x + m - 1) // m) * m


def _pick_tile_l(L, Cin, Cout, in_bytes, out_bytes, budget=12 * 1024 * 1024):
    """Largest spatial tile (multiple of 128) whose double-buffered working set
    fits a conservative VMEM budget (safe under default scoped limits on
    v5e / v6e / v7x)."""
    tl = 2048
    while tl > 128:
        need = (2 * tl * Cin * in_bytes        # double-buffered x tiles
                + 2 * tl * Cout * out_bytes    # double-buffered out tiles
                + Cout * Cin * 2               # resident bf16 weight
                + 2 * Cin * 4)                 # scale / shift
        if need <= budget:
            break
        tl //= 2
    return min(tl, _round_up(L, 128))


def _transition_kernel(x_ref, scale_ref, shift_ref, w_ref, o_ref):
    # x_ref:     (1, Cin, TL)   spatial tile (lanes = spatial)
    # scale_ref: (Cin, 1) f32   BN scale  = gamma / sqrt(var + eps)
    # shift_ref: (Cin, 1) f32   BN shift  = beta - mean * scale
    # w_ref:     (Cout, Cin)    bf16 1x1-conv weight
    # o_ref:     (1, Cout, TL)
    x = x_ref[0].astype(jnp.float32)                                # (Cin, TL)
    y = jnp.maximum(x * scale_ref[...] + shift_ref[...], 0.0)       # BN + ReLU (f32 VPU)
    acc = jnp.dot(w_ref[...], y.astype(jnp.bfloat16),               # bf16 MXU, f32 acc
                  preferred_element_type=jnp.float32)               # (Cout, TL)
    o_ref[0] = acc.astype(o_ref.dtype)


def transition_w_o_pooling(x_nchw, gamma, beta, running_mean, running_var,
                           conv_weight, *, eps=1e-5, tile_l=None):
    """x_nchw: (N, Cin, H, W); conv_weight: (Cout, Cin, 1, 1). Returns NCHW."""
    N, Cin, H, W = x_nchw.shape
    Cout = conv_weight.shape[0]
    L = H * W
    out_dtype = x_nchw.dtype

    # Fold BN (inference mode, running statistics) into per-channel scale/shift.
    inv_std = 1.0 / jnp.sqrt(running_var.astype(jnp.float32) + eps)
    scale_v = gamma.astype(jnp.float32) * inv_std                   # (Cin,)
    shift_v = beta.astype(jnp.float32) - running_mean.astype(jnp.float32) * scale_v
    scale = scale_v.reshape(Cin, 1)
    shift = shift_v.reshape(Cin, 1)

    # 1x1 conv weight -> (Cout, Cin), bf16 for the MXU.
    w2d = conv_weight.reshape(Cout, Cin).astype(jnp.bfloat16)

    # NCHW -> (N, Cin, L): pure reshape, no data movement.
    x3d = x_nchw.reshape(N, Cin, L)

    in_bytes = jnp.dtype(x_nchw.dtype).itemsize
    out_bytes = jnp.dtype(out_dtype).itemsize
    if tile_l is None:
        tl = _pick_tile_l(L, Cin, Cout, in_bytes, out_bytes)
    else:
        tl = min(_round_up(tile_l, 128), _round_up(L, 128))

    # cdiv grid: the (single) boundary tile is handled by Pallas masking — no
    # explicit jnp.pad (i.e. no extra HBM copy of the whole input).
    grid = (N, pl.cdiv(L, tl))

    out3d = pl.pallas_call(
        _transition_kernel,
        out_shape=jax.ShapeDtypeStruct((N, Cout, L), out_dtype),
        grid_spec=pltpu.PrefetchScalarGridSpec(
            num_scalar_prefetch=0,
            grid=grid,
            in_specs=[
                pl.BlockSpec((1, Cin, tl), lambda n, l: (n, 0, l)),
                pl.BlockSpec((Cin, 1), lambda n, l: (0, 0)),
                pl.BlockSpec((Cin, 1), lambda n, l: (0, 0)),
                pl.BlockSpec((Cout, Cin), lambda n, l: (0, 0)),
            ],
            out_specs=pl.BlockSpec((1, Cout, tl), lambda n, l: (n, 0, l)),
        ),
        compiler_params=pltpu.CompilerParams(
            dimension_semantics=("parallel", "parallel"),
        ),
    )(x3d, scale, shift, w2d)

    # (N, Cout, L) -> NCHW, pure reshape.
    return out3d.reshape(N, Cout, H, W)


def _reference(x_nchw, gamma, beta, running_mean, running_var, conv_weight, eps=1e-5):
    inv = 1.0 / jnp.sqrt(running_var + eps)
    xn = (x_nchw - running_mean[None, :, None, None]) * inv[None, :, None, None]
    xn = xn * gamma[None, :, None, None] + beta[None, :, None, None]
    xr = jnp.maximum(xn, 0.0)
    w = conv_weight[:, :, 0, 0]  # (Cout, Cin)
    return jnp.einsum("nchw,oc->nohw", xr, w)


if __name__ == "__main__":
    key = jax.random.PRNGKey(0)
    k_x, k_w, k_g, k_b, k_m, k_v = jax.random.split(key, 6)

    N, Cin, H, W = 2, 4, 16, 16
    Cout = 8

    x = jax.random.normal(k_x, (N, Cin, H, W), dtype=jnp.float32)
    conv_weight = jax.random.normal(k_w, (Cout, Cin, 1, 1), dtype=jnp.float32) * 0.1
    gamma = 1.0 + 0.1 * jax.random.normal(k_g, (Cin,), dtype=jnp.float32)
    beta = 0.1 * jax.random.normal(k_b, (Cin,), dtype=jnp.float32)
    running_mean = 0.1 * jax.random.normal(k_m, (Cin,), dtype=jnp.float32)
    running_var = jnp.abs(jax.random.normal(k_v, (Cin,), dtype=jnp.float32)) + 0.5

    out = transition_w_o_pooling(x, gamma, beta, running_mean, running_var, conv_weight)
    out = jax.block_until_ready(out)

    ref = _reference(x, gamma, beta, running_mean, running_var, conv_weight)
    assert out.shape == (N, Cout, H, W)
    # bf16 matmul operands (f32 accumulate) -> slightly looser tolerance.
    assert jnp.allclose(out, ref, atol=2e-2, rtol=2e-2), float(
        jnp.max(jnp.abs(out - ref)))

    print("KERNEL_OK")
</pallas_src>

<mosaic_0001>
module attributes {stable_mosaic.version = 11 : i64} {
  func.func @_transition_kernel(%arg0: i32, %arg1: i32, %arg2: memref<1x4x256xf32, #tpu.memory_space<vmem>>, %arg3: memref<4x1xf32, #tpu.memory_space<vmem>>, %arg4: memref<4x1xf32, #tpu.memory_space<vmem>>, %arg5: memref<8x4xbf16, #tpu.memory_space<vmem>>, %arg6: memref<1x8x256xf32, #tpu.memory_space<vmem>>) attributes {dimension_semantics = [#tpu.dimension_semantics<parallel>, #tpu.dimension_semantics<parallel>], iteration_bounds = array<i64: 2, 1>, scalar_prefetch = 0 : i64, scratch_operands = 0 : i64, tpu.core_type = #tpu.core_type<tc>, window_params = [{transform_indices = @transform_0, window_bounds = array<i64: 1, 4, 256>}, {pipeline_mode = #tpu.pipeline_mode<synchronous>, transform_indices = @transform_1, window_bounds = array<i64: 4, 1>}, {pipeline_mode = #tpu.pipeline_mode<synchronous>, transform_indices = @transform_2, window_bounds = array<i64: 4, 1>}, {pipeline_mode = #tpu.pipeline_mode<synchronous>, transform_indices = @transform_3, window_bounds = array<i64: 8, 4>}, {transform_indices = @transform_4, window_bounds = array<i64: 1, 8, 256>}]} {
    %c0 = arith.constant 0 : index
    %c0_0 = arith.constant 0 : index
    %c0_1 = arith.constant 0 : index
    %0 = vector.load %arg2[%c0, %c0_0, %c0_1] : memref<1x4x256xf32, #tpu.memory_space<vmem>>, vector<1x4x256xf32>
    %1 = vector.shape_cast %0 : vector<1x4x256xf32> to vector<4x256xf32>
    %c0_2 = arith.constant 0 : index
    %c0_3 = arith.constant 0 : index
    %2 = vector.load %arg3[%c0_2, %c0_3] : memref<4x1xf32, #tpu.memory_space<vmem>>, vector<4x1xf32>
    %3 = vector.broadcast %2 : vector<4x1xf32> to vector<4x256xf32>
    %4 = arith.mulf %1, %3 : vector<4x256xf32>
    %c0_4 = arith.constant 0 : index
    %c0_5 = arith.constant 0 : index
    %5 = vector.load %arg4[%c0_4, %c0_5] : memref<4x1xf32, #tpu.memory_space<vmem>>, vector<4x1xf32>
    %6 = vector.broadcast %5 : vector<4x1xf32> to vector<4x256xf32>
    %7 = arith.addf %4, %6 : vector<4x256xf32>
    %cst = arith.constant 0.000000e+00 : f32
    %8 = vector.broadcast %cst : f32 to vector<4x256xf32>
    %9 = arith.maximumf %7, %8 : vector<4x256xf32>
    %c0_6 = arith.constant 0 : index
    %c0_7 = arith.constant 0 : index
    %10 = vector.load %arg5[%c0_6, %c0_7] : memref<8x4xbf16, #tpu.memory_space<vmem>>, vector<8x4xbf16>
    %11 = arith.truncf %9 : vector<4x256xf32> to vector<4x256xbf16>
    %cst_8 = arith.constant dense<0.000000e+00> : vector<8x256xf32>
    %12 = tpu.matmul %10, %11, %cst_8 {dimension_numbers = #tpu.dot_dimension_numbers<[1], [0], [0], [1], [0, 0, 1, 1], [], []>} : vector<8x4xbf16>, vector<4x256xbf16>, vector<8x256xf32> -> vector<8x256xf32>
    %c0_9 = arith.constant 0 : index
    %c0_10 = arith.constant 0 : index
    %c0_11 = arith.constant 0 : index
    %13 = vector.load %arg6[%c0_9, %c0_10, %c0_11] : memref<1x8x256xf32, #tpu.memory_space<vmem>>, vector<1x8x256xf32>
    %14 = vector.shape_cast %13 : vector<1x8x256xf32> to vector<8x256xf32>
    %15 = vector.shape_cast %12 : vector<8x256xf32> to vector<1x8x256xf32>
    tpu.vector_store %arg6[%c0_9, %c0_10, %c0_11], %15 {strides = array<i32>} : memref<1x8x256xf32, #tpu.memory_space<vmem>>, vector<1x8x256xf32>,
    return
  }
  func.func @transform_0(%arg0: i32, %arg1: i32) -> (i32, i32, i32) {
    %c0_i32 = arith.constant 0 : i32
    %c0_i32_0 = arith.constant 0 : i32
    return %arg0, %c0_i32, %arg1 : i32, i32, i32
  }
  func.func @transform_1(%arg0: i32, %arg1: i32) -> (i32, i32) {
    %c0_i32 = arith.constant 0 : i32
    %c0_i32_0 = arith.constant 0 : i32
    %c0_i32_1 = arith.constant 0 : i32
    return %c0_i32, %c0_i32_0 : i32, i32
  }
  func.func @transform_2(%arg0: i32, %arg1: i32) -> (i32, i32) {
    %c0_i32 = arith.constant 0 : i32
    %c0_i32_0 = arith.constant 0 : i32
    %c0_i32_1 = arith.constant 0 : i32
    return %c0_i32, %c0_i32_0 : i32, i32
  }
  func.func @transform_3(%arg0: i32, %arg1: i32) -> (i32, i32) {
    %c0_i32 = arith.constant 0 : i32
    %c0_i32_0 = arith.constant 0 : i32
    %c0_i32_1 = arith.constant 0 : i32
    return %c0_i32, %c0_i32_0 : i32, i32
  }
  func.func @transform_4(%arg0: i32, %arg1: i32) -> (i32, i32, i32) {
    %c0_i32 = arith.constant 0 : i32
    %c0_i32_0 = arith.constant 0 : i32
    return %arg0, %c0_i32, %arg1 : i32, i32, i32
  }
}

</mosaic_0001>

<llo_original>
// kernel: tpu_custom_call.1
$region0: #{tpu_custom_call.1}
  #allocation0 [shape = 'u32[]', space=smem, size = 0x4, offset = 0x4, fixed_abs, tag = 'smem constant byte address 0x4 - core index']
  #allocation1 [shape = 'u32[144,128]{1,0:T(1,128)}', space=vmem, size = 0x12000, scoped, tag = 'internal scratch']
  %s0 = inlined_call_operand.hbm [shape: f32[2,4,256], index: 0, kind: input, shape index: {}]
  %s1 = inlined_call_operand.vmem [shape: f32[4,1], index: 1, kind: input, shape index: {}]
  %s2 = inlined_call_operand.vmem [shape: f32[4,1], index: 2, kind: input, shape index: {}]
  %s3 = inlined_call_operand.vmem [shape: bf16[8,4], index: 3, kind: input, shape index: {}]
  %s4 = inlined_call_operand.hbm [shape: f32[2,8,256], index: 4, kind: output, shape index: {}]
  %s5 = sld [smem:[#allocation0]]
  $region53: #{tpu_custom_call.1} parent=0
    _
  %s7 = ssub.s32 1, %s5
  %s8 = scalar_select 0, %s7, %s5
  $region1: #{tpu_custom_call.1} parent=0
    #allocation2 [shape = 'u8[8192]{0}', space=vmem, size = 0x2000, scoped, tag = 'input window, operand 0']
    #allocation3 [shape = 's32[2]{0}', space=sflag, size = 0x8, scoped, tag = 'scoped memory for tpu_custom_call.1']
    #allocation4 [shape = 's32[2]{0}', space=sflag, size = 0x8, scoped, tag = 'scoped memory for tpu_custom_call.1']
    #allocation5 [shape = 'u8[16384]{0}', space=vmem, size = 0x4000, scoped, tag = 'output window, operand 0']
    %9 = vsyncpa [#allocation3], 0
    %s10 = scalar_lea.sflag [#allocation3], 1
    %11 = vsyncpa %s10, 0
    %12 = vsyncpa [#allocation4], 0
    %s13 = scalar_lea.sflag [#allocation4], 1
    %14 = vsyncpa %s13, 0
    loop: start=0, step=1, limit=4
    $region2: #{tpu_custom_call.1} parent=1 // loop_pre_header
      _
    $region3: #{tpu_custom_call.1} parent=1 // loop_header
      %s16 = sphi 0, %s20
      %p17 = scmp.ge.s32.totalorder %s16, 4
      %s23 = sphi 0, %s35
      %s24 = sphi 0, %s31
      %s25 = sphi 0, %s23
      %s26 = sphi 0, %s24
      %s27 = sphi 0, %s25
      %s28 = sphi 0, %s26
      %s40 = sphi 0, %s42
      %s43 = sphi 0, %s40
      %s44 = sphi 0, %s43
      %s60 = sphi 0, %s44
      %s64 = sphi 0, %s64
      %s66 = sphi 0, %s64
      %s67 = sphi 0, %s66
      %s81 = sphi 0, %s67
      %s85 = sphi 0, %s85
      %s87 = sphi 0, %s85
      %s88 = sphi 0, %s87
      %s102 = sphi 0, %s88
      %s106 = sphi 0, %s106
      %s108 = sphi 0, %s106
      %s109 = sphi 0, %s108
      %s123 = sphi 0, %s109
      %s131 = sphi 0, %s133
      %s134 = sphi 0, %s131
      %s135 = sphi 0, %s134
      %s151 = sphi 0, %s135
    $region4: #{tpu_custom_call.1} parent=1 // loop_header_branch
      %19 = sbr.rel (%p17) target = $region8
    $region5: #{tpu_custom_call.1} parent=1 // loop_body
      %s21 = ssub.s32 %s16, 1
      %s22 = ssub.s32 %s16, 2
      %s29 = sadd.s32 1, %s24
      %p30 = scmp.ge.s32.totalorder %s29, 1
      %s31 = scalar_select %p30, 0, %s29
      %s32 = sadd.s32 1, %s23
      %s33 = scalar_select %p30, %s32, %s23
      %p34 = scmp.ge.s32.totalorder %s33, 2
      %s35 = scalar_select %p34, 0, %s33
      %s36 = ssub.s32 %s23, %s35
      %s37 = ssub.s32 %s24, %s31
      %s38 = sor.u32 %s36, %s37
      %p39 = scmp.eq.s32.totalorder %s38, 0
      %s41 = sadd.s32 %s40, 1
      %s42 = scalar_select %p39, %s40, %s41
      %p45 = pneg %p39
      %p46 = scmp.eq.s32.totalorder %s16, 1
      %p47 = por %p45, %p46
      %p48 = scmp.ne.s32.totalorder %s40, %s43
      %p49 = scmp.eq.s32.totalorder %s16, 0
      %p50 = por %p48, %p49
      %p51 = scmp.ne.s32.totalorder %s40, %s43
      %p52 = scmp.eq.s32.totalorder %s21, 1
      %p53 = por %p51, %p52
      %p54 = scmp.ne.s32.totalorder %s43, %s44
      %p55 = scmp.eq.s32.totalorder %s21, 0
      %p56 = por %p54, %p55
      %p57 = scmp.ne.s32.totalorder %s43, %s44
      %p58 = scmp.eq.s32.totalorder %s22, 1
      %p59 = por %p57, %p58
      %p61 = scmp.ne.s32.totalorder %s44, %s60
      %p62 = scmp.eq.s32.totalorder %s22, 0
      %p63 = por %p61, %p62
      %s65 = sadd.s32 %s64, 1
      %p68 = scmp.eq.s32.totalorder %s16, 1
      %p69 = scmp.ne.s32.totalorder %s64, %s66
      %p70 = scmp.eq.s32.totalorder %s16, 0
      %p71 = por %p69, %p70
      %p72 = scmp.ne.s32.totalorder %s64, %s66
      %p73 = scmp.eq.s32.totalorder %s21, 1
      %p74 = por %p72, %p73
      %p75 = scmp.ne.s32.totalorder %s66, %s67
      %p76 = scmp.eq.s32.totalorder %s21, 0
      %p77 = por %p75, %p76
      %p78 = scmp.ne.s32.totalorder %s66, %s67
      %p79 = scmp.eq.s32.totalorder %s22, 1
      %p80 = por %p78, %p79
      %p82 = scmp.ne.s32.totalorder %s67, %s81
      %p83 = scmp.eq.s32.totalorder %s22, 0
      %p84 = por %p82, %p83
      %s86 = sadd.s32 %s85, 1
      %p89 = scmp.eq.s32.totalorder %s16, 1
      %p90 = scmp.ne.s32.totalorder %s85, %s87
      %p91 = scmp.eq.s32.totalorder %s16, 0
      %p92 = por %p90, %p91
      %p93 = scmp.ne.s32.totalorder %s85, %s87
      %p94 = scmp.eq.s32.totalorder %s21, 1
      %p95 = por %p93, %p94
      %p96 = scmp.ne.s32.totalorder %s87, %s88
      %p97 = scmp.eq.s32.totalorder %s21, 0
      %p98 = por %p96, %p97
      %p99 = scmp.ne.s32.totalorder %s87, %s88
      %p100 = scmp.eq.s32.totalorder %s22, 1
      %p101 = por %p99, %p100
      %p103 = scmp.ne.s32.totalorder %s88, %s102
      %p104 = scmp.eq.s32.totalorder %s22, 0
      %p105 = por %p103, %p104
      %s107 = sadd.s32 %s106, 1
      %p110 = scmp.eq.s32.totalorder %s16, 1
      %p111 = scmp.ne.s32.totalorder %s106, %s108
      %p112 = scmp.eq.s32.totalorder %s16, 0
      %p113 = por %p111, %p112
      %p114 = scmp.ne.s32.totalorder %s106, %s108
      %p115 = scmp.eq.s32.totalorder %s21, 1
      %p116 = por %p114, %p115
      %p117 = scmp.ne.s32.totalorder %s108, %s109
      %p118 = scmp.eq.s32.totalorder %s21, 0
      %p119 = por %p117, %p118
      %p120 = scmp.ne.s32.totalorder %s108, %s109
      %p121 = scmp.eq.s32.totalorder %s22, 1
      %p122 = por %p120, %p121
      %p124 = scmp.ne.s32.totalorder %s109, %s123
      %p125 = scmp.eq.s32.totalorder %s22, 0
      %p126 = por %p124, %p125
      %s127 = ssub.s32 %s23, %s35
      %s128 = ssub.s32 %s24, %s31
      %s129 = sor.u32 %s127, %s128
      %p130 = scmp.eq.s32.totalorder %s129, 0
      %s132 = sadd.s32 %s131, 1
      %s133 = scalar_select %p130, %s131, %s132
      %p136 = pneg %p130
      %p137 = scmp.eq.s32.totalorder %s16, 1
      %p138 = por %p136, %p137
      %p139 = scmp.ne.s32.totalorder %s131, %s134
      %p140 = scmp.eq.s32.totalorder %s16, 0
      %p141 = por %p139, %p140
      %p142 = scmp.ne.s32.totalorder %s131, %s134
      %p143 = scmp.eq.s32.totalorder %s21, 1
      %p144 = por %p142, %p143
      %p145 = scmp.ne.s32.totalorder %s134, %s135
      %p146 = scmp.eq.s32.totalorder %s21, 0
      %p147 = por %p145, %p146
      %p148 = scmp.ne.s32.totalorder %s134, %s135
      %p149 = scmp.eq.s32.totalorder %s22, 1
      %p150 = por %p148, %p149
      %p152 = scmp.ne.s32.totalorder %s135, %s151
      %p153 = scmp.eq.s32.totalorder %s22, 0
      %p154 = por %p152, %p153
      %p155 = scmp.le.s32.totalorder 1, %s16
      %p156 = scmp.lt.s32.totalorder %s16, 3
      %p157 = pnand %p155, %p156
      %p158 = pneg %p157
      // Predicated region
      $region9: #{tpu_custom_call.1} parent=5 // pred_check
        _
      $region10: #{tpu_custom_call.1} parent=5 // pred_check_branch
        %160 = sbr.rel (%p157) target = $region12
      $region11: #{tpu_custom_call.1} parent=5 // pred_region
        %s161 = ssub.s32 %s16, 1
        // Predicated region
        $region13: #{tpu_custom_call.1} parent=11 // pred_check
          %p162 = pneg %p77
        $region14: #{tpu_custom_call.1} parent=11 // pred_check_branch
          %164 = sbr.rel (%p162) target = $region16
        $region15: #{tpu_custom_call.1} parent=11 // pred_region
          _
        $region16: #{tpu_custom_call.1} parent=11 // pred_fallthru
          _
        // Predicated region
        $region17: #{tpu_custom_call.1} parent=11 // pred_check
          %p165 = pneg %p98
        $region18: #{tpu_custom_call.1} parent=11 // pred_check_branch
          %167 = sbr.rel (%p165) target = $region20
        $region19: #{tpu_custom_call.1} parent=11 // pred_region
          _
        $region20: #{tpu_custom_call.1} parent=11 // pred_fallthru
          _
        // Predicated region
        $region21: #{tpu_custom_call.1} parent=11 // pred_check
          %p168 = pneg %p119
        $region22: #{tpu_custom_call.1} parent=11 // pred_check_branch
          %170 = sbr.rel (%p168) target = $region24
        $region23: #{tpu_custom_call.1} parent=11 // pred_region
          _
        $region24: #{tpu_custom_call.1} parent=11 // pred_fallthru
          _
      $region12: #{tpu_custom_call.1} parent=5 // pred_fallthru
        _
      %p171 = scmp.lt.s32.totalorder %s16, 2
      // Predicated region
      $region25: #{tpu_custom_call.1} parent=5 // pred_check
        %p172 = pneg %p171
      $region26: #{tpu_custom_call.1} parent=5 // pred_check_branch
        %174 = sbr.rel (%p172) target = $region28
      $region27: #{tpu_custom_call.1} parent=5 // pred_region
        // Predicated region
        $region29: #{tpu_custom_call.1} parent=27 // pred_check
          %p175 = pneg %p50
        $region30: #{tpu_custom_call.1} parent=27 // pred_check_branch
          %177 = sbr.rel (%p175) target = $region32
        $region31: #{tpu_custom_call.1} parent=27 // pred_region
          %s178 = sand.u32 %s40, 1
          %s179 = scalar_lea.sflag [#allocation3], %s178
          %s180 = sand.u32 %s40, 1
          %s181 = smul.addr %s180, 8
          %s182 = scalar_lea.vmem [#allocation2], %s181
          %s183 = smul.u32 2, %s24
          %s185 = ssub.s32 128, 128
          %186 = vsyncadd %s179, %s185
          %s187 = smul.addr %s23, 2
          %s188 = sadd.s32 %s183, %s187
          %s189 = smul.addr %s188, 64
          %s190 = scalar_lea.hbm %s0, %s189
          %s192 = sshll.u32 %s182, 4
          %s193 = int_to_ptr.vmem [resolvable:$true] %s192
          %195 = dma.hbm_to_vmem [thread:$0]  %s190, 128, %s193, %s179
        $region32: #{tpu_custom_call.1} parent=27 // pred_fallthru
          _
      $region28: #{tpu_custom_call.1} parent=5 // pred_fallthru
        _
      %p196 = scmp.le.s32.totalorder 1, %s16
      %p197 = scmp.lt.s32.totalorder %s16, 3
      %p198 = pnand %p196, %p197
      %p199 = pneg %p198
      // Predicated region
      $region33: #{tpu_custom_call.1} parent=5 // pred_check
        _
      $region34: #{tpu_custom_call.1} parent=5 // pred_check_branch
        %201 = sbr.rel (%p198) target = $region36
      $region35: #{tpu_custom_call.1} parent=5 // pred_region
        %s202 = ssub.s32 %s16, 1
        %s203 = sand.u32 %s43, 1
        %s204 = scalar_lea.sflag [#allocation3], %s203
        %s205 = sand.u32 %s43, 1
        %s206 = smul.addr %s205, 8
        %s207 = scalar_lea.vmem [#allocation2], %s206
        // Predicated region
        $region37: #{tpu_custom_call.1} parent=35 // pred_check
          %p208 = pneg %p56
        $region38: #{tpu_custom_call.1} parent=35 // pred_check_branch
          %210 = sbr.rel (%p208) target = $region40
        $region39: #{tpu_custom_call.1} parent=35 // pred_region
          %211 = dma.done %s204, 128
        $region40: #{tpu_custom_call.1} parent=35 // pred_fallthru
          _
        %s212 = sand.u32 %s43, 1
        %s213 = scalar_lea.sflag [#allocation3], %s212
        %s214 = sand.u32 %s43, 1
        %s215 = smul.addr %s214, 8
        %s216 = scalar_lea.vmem [#allocation2], %s215
        %p217 = pneg %p56
        %p218 = pneg %p53
        %p219 = pneg %p77
        %p220 = pneg %p74
        %p221 = pneg %p98
        %p222 = pneg %p95
        %p223 = pneg %p119
        %p224 = pneg %p116
        %p225 = pneg %p147
        %p226 = pneg %p144
        %s227 = sand.u32 %s134, 1
        %s228 = scalar_lea.sflag [#allocation4], %s227
        %s229 = sand.u32 %s134, 1
        %s230 = smul.addr %s229, 16
        %s231 = scalar_lea.vmem [#allocation5], %s230
        %s232 = smul.u32 2, %s26
        %s233 = smul.u32 2, %s26
        %v235 = vld [vmem:[%s207] sm:$0xff]
        %v236 = vld [vmem:[%s1] sm:$0xf]
        %238 = vset.pattern.permute.xlu0 0
        %239 = vperm.xlu0 %238, %v236
        %v240 = vpop.permute.xlu0 %239
        %v242 = vunpack.c.l.s4 839922192
        %v243 = vunpack.c.0.s8 %v242
        %v244 = vlaneseq
        %v245 = vshrl.u32 %v244, 7
        %v246 = vsub.s32 %v243, %v245
        %v247 = vrot.slane %v240, %v246
        %v249 = vmul.f32 %v235, %v247
        %v250 = vld [vmem:[%s2] sm:$0xf]
        %252 = vset.pattern.permute.xlu0 0
        %253 = vperm.xlu0 %252, %v250
        %v254 = vpop.permute.xlu0 %253
        %v256 = vunpack.c.l.s4 839922192
        %v257 = vunpack.c.0.s8 %v256
        %v258 = vlaneseq
        %v259 = vshrl.u32 %v258, 7
        %v260 = vsub.s32 %v257, %v259
        %v261 = vrot.slane %v254, %v260
        %v263 = vadd.f32 %v249, %v261
        %v264 = vmax.f32 %v263, 0.0
        %v265 = vld [vmem:[%s3] sm:$0xf]
        %v267 = vcombine.high %v264, %v264
        %v269 = vpack.c.bf16 %v264, %v264
        %v270 = vpack.c.bf16 %v267, %v267
        %vm271 = vcmask 31744
        %v273 = vsel %vm271, %v265, 0
        %vm275 = vcmask 1041408
        %v277 = vsel %vm275, %v269, 0
        %v280 = vsel %vm275, %v270, 0
        %282 = vmatprep.subr.bf16.mxu0 %v280
        %283 = vmatpush1.bf16.msra.mxu0 %v277
        %284 = vmatprep.subr.bf16.mxu0 0
        %285 = vmatpush1.bf16.msra.mxu0 0
        %286 = vmatprep.subr.bf16.mxu0 0
        %287 = vmatpush1.bf16.msra.mxu0 0
        %288 = vmatprep.subr.bf16.mxu0 0
        %289 = vmatpush1.bf16.msra.mxu0 0
        %290 = vmatprep.subr.bf16.mxu0 0
        %291 = vmatpush1.bf16.msra.mxu0 0
        %292 = vmatprep.subr.bf16.mxu0 0
        %293 = vmatpush1.bf16.msra.mxu0 0
        %294 = vmatprep.subr.bf16.mxu0 0
        %295 = vmatpush1.bf16.msra.mxu0 0
        %296 = vmatprep.subr.bf16.mxu0 0
        %297 = vmatpush1.bf16.msra.mxu0 0
        %298 = vmatprep.subr.bf16.mxu0 0
        %299 = vmatpush1.bf16.msra.mxu0 0
        %300 = vmatprep.subr.bf16.mxu0 0
        %301 = vmatpush1.bf16.msra.mxu0 0
        %302 = vmatprep.subr.bf16.mxu0 0
        %303 = vmatpush1.bf16.msra.mxu0 0
        %304 = vmatprep.subr.bf16.mxu0 0
        %305 = vmatpush1.bf16.msra.mxu0 0
        %306 = vmatprep.subr.bf16.mxu0 0
        %307 = vmatpush1.bf16.msra.mxu0 0
        %308 = vmatprep.subr.bf16.mxu0 0
        %309 = vmatpush1.bf16.msra.mxu0 0
        %310 = vmatprep.subr.bf16.mxu0 0
        %311 = vmatpush1.bf16.msra.mxu0 0
        %312 = vmatprep.subr.bf16.mxu0 0
        %313 = vmatpush1.bf16.msra.mxu0 0
        %314 = vmatprep.mubr.bf16.mxu0 0
        %315 = vmatmul.mubr.bf16.gmra.mrb[0].mxu0 %v273
        %v316 = vpop.f32.mrb[0].mxu0
        %v317 = vadd.f32 0.0, %v316
        %v318 = vpop.f32.mrb[0].mxu0
        %v319 = vadd.f32 0.0, %v318
        %v320 = vpop.f32.mrb[0].mxu0
        %v321 = vpop.f32.mrb[0].mxu0
        %322 = vdwg.mxu0
        %323 = vst [vmem:[%s231] sm:$0xff] %v317
        %324 = vst [vmem:[%s231 + $0x8] sm:$0xff] %v319
        %s325 = sand.u32 %s134, 1
        %s326 = scalar_lea.sflag [#allocation4], %s325
        %s327 = sand.u32 %s134, 1
        %s328 = smul.addr %s327, 16
        %s329 = scalar_lea.vmem [#allocation5], %s328
        // Predicated region
        $region41: #{tpu_custom_call.1} parent=35 // pred_check
          %p330 = pneg %p144
        $region42: #{tpu_custom_call.1} parent=35 // pred_check_branch
          %332 = sbr.rel (%p330) target = $region44
        $region43: #{tpu_custom_call.1} parent=35 // pred_region
          %s333 = smul.u32 2, %s26
          %s335 = ssub.s32 256, 256
          %336 = vsyncadd %s326, %s335
          %s337 = smul.addr %s25, 2
          %s338 = sadd.s32 %s333, %s337
          %s339 = smul.addr %s338, 128
          %s340 = scalar_lea.hbm %s4, %s339
          %s342 = sshll.u32 %s329, 4
          %s343 = int_to_ptr.vmem [resolvable:$true] %s342
          %345 = dma.vmem_to_hbm [thread:$0]  %s343, 256, %s340, %s326
        $region44: #{tpu_custom_call.1} parent=35 // pred_fallthru
          _
      $region36: #{tpu_custom_call.1} parent=5 // pred_fallthru
        _
      %p346 = scmp.le.s32.totalorder 2, %s16
      // Predicated region
      $region45: #{tpu_custom_call.1} parent=5 // pred_check
        %p347 = pneg %p346
      $region46: #{tpu_custom_call.1} parent=5 // pred_check_branch
        %349 = sbr.rel (%p347) target = $region48
      $region47: #{tpu_custom_call.1} parent=5 // pred_region
        %s350 = ssub.s32 %s16, 2
        // Predicated region
        $region49: #{tpu_custom_call.1} parent=47 // pred_check
          %p351 = pneg %p150
        $region50: #{tpu_custom_call.1} parent=47 // pred_check_branch
          %353 = sbr.rel (%p351) target = $region52
        $region51: #{tpu_custom_call.1} parent=47 // pred_region
          %s354 = sand.u32 %s135, 1
          %s355 = scalar_lea.sflag [#allocation4], %s354
          %s356 = sand.u32 %s135, 1
          %s357 = smul.addr %s356, 16
          %s358 = scalar_lea.vmem [#allocation5], %s357
          %359 = dma.done %s355, 256
        $region52: #{tpu_custom_call.1} parent=47 // pred_fallthru
          _
      $region48: #{tpu_custom_call.1} parent=5 // pred_fallthru
        _
    $region6: #{tpu_custom_call.1} parent=1 // loop_footer
      %s20 = sadd.s32 1, %s16
    $region7: #{tpu_custom_call.1} parent=1 // loop_footer_branch
      %15 = sbr.rel target = $region3
    $region8: #{tpu_custom_call.1} parent=1 // loop_exit
      _
    %360 = vsyncpa [#allocation3], 1
    %s361 = scalar_lea.sflag [#allocation3], 1
    %362 = vsyncpa %s361, 1
    %363 = vsyncpa [#allocation4], 1
    %s364 = scalar_lea.sflag [#allocation4], 1
    %365 = vsyncpa %s364, 1

</llo_original>
